<compile_context>
chip_gen: v6e
topology: v6e:2x2x1
jax: 0.10.0
libtpu: 0.0.40
codegen_flags: <defaults>
</compile_context>

<pallas_src>
import jax
import jax.numpy as jnp
from jax.experimental import pallas as pl
from jax.experimental.pallas import tpu as pltpu


def _out_block_kernel(w_ref, b_ref, x_ref, o_ref):
    """w_ref: SMEM (Cout, Cin); b_ref: SMEM (Cout,);
    x_ref: VMEM (1, Cin, rows_tile, 128); o_ref: VMEM (1, Cout, rows_tile, 128)."""
    cin = x_ref.shape[1]
    cout = o_ref.shape[1]
    # Hoist channel loads: each (rows_tile, 128) input slab is read exactly once.
    xs = [x_ref[0, ci].astype(jnp.float32) for ci in range(cin)]
    # Fully unrolled over the tiny, static channel counts.
    for co in range(cout):
        acc = xs[0] * w_ref[co, 0] + b_ref[co]
        for ci in range(1, cin):
            acc = acc + xs[ci] * w_ref[co, ci]
        o_ref[0, co] = acc.astype(o_ref.dtype)


def _round_up(x, m):
    return -(-x // m) * m


def out_block_forward(x, weight, bias):
    """OutBlock.forward (ConvTranspose with kernel_size=1, stride=1).

    x      : (N, Cin, *spatial)        ('2d': H, W ; '3d': D, H, W)
    weight : (Cin, Cout, 1, 1[, 1])    (PyTorch ConvTranspose weight layout)
    bias   : (Cout,)
    returns: (N, Cout, *spatial)
    """
    n, cin = int(x.shape[0]), int(x.shape[1])
    spatial = tuple(int(s) for s in x.shape[2:])
    cout = int(weight.shape[1])
    itemsize = jnp.dtype(x.dtype).itemsize

    w = jnp.asarray(weight, jnp.float32).reshape(cin, cout).T  # (Cout, Cin), tiny
    b = jnp.asarray(bias, jnp.float32).reshape(cout)

    hw = 1
    for s in spatial:
        hw *= s
    rows_total = _round_up(hw, 128) // 128  # lane axis folded into (rows, 128)

    # rows_tile: multiple of 8 (dense sublanes, unmasked stores), large enough to
    # amortize per-step overhead, small enough that the double-buffered working
    # set (2 * (Cin+Cout) * rows_tile * 128 * itemsize) fits the default 32 MiB
    # scoped VMEM on every generation (incl. v7x's 64 MiB physical VMEM).
    vmem_budget = 24 * 1024 * 1024
    bytes_per_row = 2 * (cin + cout) * 128 * itemsize
    max_rows_tile = max(8, (vmem_budget // bytes_per_row) // 8 * 8)
    rows_tile = min(_round_up(rows_total, 8), max_rows_tile, 4096)

    rows_padded = _round_up(rows_total, rows_tile)
    num_row_tiles = rows_padded // rows_tile

    # v7x megacore: avoid a single-step grid (one TC idle) when splittable.
    if n == 1 and num_row_tiles == 1 and rows_tile >= 16:
        rows_tile = _round_up(rows_tile // 2, 8)
        rows_padded = _round_up(rows_total, rows_tile)
        num_row_tiles = rows_padded // rows_tile

    hw_padded = rows_padded * 128
    x3 = x.reshape(n, cin, hw)  # contiguous reshape, no data movement
    if hw_padded != hw:
        x3 = jnp.pad(x3, ((0, 0), (0, 0), (0, hw_padded - hw)))
    x4 = x3.reshape(n, cin, rows_padded, 128)

    cost = pl.CostEstimate(
        flops=2 * cin * cout * n * hw_padded,
        transcendentals=0,
        bytes_accessed=(cin + cout) * n * hw_padded * itemsize,
    )

    y4 = pl.pallas_call(
        _out_block_kernel,
        out_shape=jax.ShapeDtypeStruct((n, cout, rows_padded, 128), x.dtype),
        grid=(n, num_row_tiles),
        in_specs=[
            pl.BlockSpec(memory_space=pltpu.MemorySpace.SMEM),  # weights (Cout, Cin)
            pl.BlockSpec(memory_space=pltpu.MemorySpace.SMEM),  # bias (Cout,)
            pl.BlockSpec((1, cin, rows_tile, 128), lambda i, s: (i, 0, s, 0)),
        ],
        out_specs=pl.BlockSpec((1, cout, rows_tile, 128), lambda i, s: (i, 0, s, 0)),
        compiler_params=pltpu.CompilerParams(
            dimension_semantics=("parallel", "parallel"),
        ),
        cost_estimate=cost,
    )(w, b, x4)

    y3 = y4.reshape(n, cout, hw_padded)
    if hw_padded != hw:
        y3 = y3[:, :, :hw]
    return y3.reshape((n, cout) + spatial)


if __name__ == "__main__":
    key = jax.random.PRNGKey(0)
    k_x, k_w, k_b, k_x2, k_x3, k_x4 = jax.random.split(key, 6)

    # Small shapes consistent with the module (dim='2d').
    batch, in_channels, n_classes, spatial = 2, 4, 3, 16

    # ConvTranspose2d(in_channels, n_classes, kernel_size=1) parameters:
    #   weight: (in_channels, n_classes, 1, 1), bias: (n_classes,)
    bound = 1.0 / (in_channels ** 0.5)
    weight = jax.random.uniform(
        k_w, (in_channels, n_classes, 1, 1), jnp.float32, minval=-bound, maxval=bound
    )
    bias = jax.random.uniform(
        k_b, (n_classes,), jnp.float32, minval=-bound, maxval=bound
    )
    w2 = weight.reshape(in_channels, n_classes)

    def ref2d(xx):
        return jnp.einsum("nchw,cd->ndhw", xx, w2) + bias[None, :, None, None]

    # 2d, spatial 16x16 (flattened lane axis = 256 -> 2 rows of 128).
    x = jax.random.normal(k_x, (batch, in_channels, spatial, spatial), jnp.float32)
    y = jax.block_until_ready(out_block_forward(x, weight, bias))
    assert y.shape == (batch, n_classes, spatial, spatial)
    assert jnp.allclose(y, ref2d(x), atol=1e-5, rtol=1e-5)

    # 2d, odd spatial size (15x15 = 225 -> exercises the lane/row-padding path).
    x_odd = jax.random.normal(k_x2, (batch, in_channels, 15, 15), jnp.float32)
    y_odd = jax.block_until_ready(out_block_forward(x_odd, weight, bias))
    assert y_odd.shape == (batch, n_classes, 15, 15)
    assert jnp.allclose(y_odd, ref2d(x_odd), atol=1e-5, rtol=1e-5)

    # 3d (dim='3d', ConvTranspose3d kernel_size=1): same math, spatial flattened.
    weight3d = weight.reshape(in_channels, n_classes, 1, 1, 1)
    x3d = jax.random.normal(k_x3, (batch, in_channels, 6, 6, 6), jnp.float32)
    y3d = jax.block_until_ready(out_block_forward(x3d, weight3d, bias))
    ref3d = jnp.einsum("ncdhw,ce->nedhw", x3d, w2) + bias[None, :, None, None, None]
    assert y3d.shape == (batch, n_classes, 6, 6, 6)
    assert jnp.allclose(y3d, ref3d, atol=1e-5, rtol=1e-5)

    # bf16 input path (halves HBM traffic on the memory-bound op; f32 accumulate).
    x_bf = jax.random.normal(k_x4, (batch, in_channels, spatial, spatial),
                             jnp.bfloat16)
    y_bf = jax.block_until_ready(out_block_forward(x_bf, weight, bias))
    assert y_bf.dtype == jnp.bfloat16 and y_bf.shape == (batch, n_classes, spatial, spatial)
    assert jnp.allclose(y_bf.astype(jnp.float32),
                        ref2d(x_bf.astype(jnp.float32)), atol=3e-2, rtol=3e-2)

    print("KERNEL_OK")
</pallas_src>

<mosaic_0001>
module attributes {stable_mosaic.version = 11 : i64} {
  func.func @_out_block_kernel(%arg0: i32, %arg1: i32, %arg2: memref<3x4xf32, #tpu.memory_space<smem>>, %arg3: memref<3xf32, #tpu.memory_space<smem>>, %arg4: memref<1x4x8x128xf32, #tpu.memory_space<vmem>>, %arg5: memref<1x3x8x128xf32, #tpu.memory_space<vmem>>) attributes {dimension_semantics = [#tpu.dimension_semantics<parallel>, #tpu.dimension_semantics<parallel>], iteration_bounds = array<i64: 2, 1>, scalar_prefetch = 0 : i64, scratch_operands = 0 : i64, tpu.core_type = #tpu.core_type<tc>, window_params = [{transform_indices = @transform_0, window_bounds = array<i64: 3, 4>}, {transform_indices = @transform_1, window_bounds = array<i64: 3>}, {transform_indices = @transform_2, window_bounds = array<i64: 1, 4, 8, 128>}, {transform_indices = @transform_3, window_bounds = array<i64: 1, 3, 8, 128>}]} {
    %c0 = arith.constant 0 : index
    %c0_0 = arith.constant 0 : index
    %c0_1 = arith.constant 0 : index
    %c0_2 = arith.constant 0 : index
    %0 = vector.load %arg4[%c0, %c0_0, %c0_1, %c0_2] : memref<1x4x8x128xf32, #tpu.memory_space<vmem>>, vector<1x1x8x128xf32>
    %1 = vector.shape_cast %0 : vector<1x1x8x128xf32> to vector<8x128xf32>
    %c0_3 = arith.constant 0 : index
    %c1 = arith.constant 1 : index
    %c0_4 = arith.constant 0 : index
    %c0_5 = arith.constant 0 : index
    %2 = vector.load %arg4[%c0_3, %c1, %c0_4, %c0_5] : memref<1x4x8x128xf32, #tpu.memory_space<vmem>>, vector<1x1x8x128xf32>
    %3 = vector.shape_cast %2 : vector<1x1x8x128xf32> to vector<8x128xf32>
    %c0_6 = arith.constant 0 : index
    %c2 = arith.constant 2 : index
    %c0_7 = arith.constant 0 : index
    %c0_8 = arith.constant 0 : index
    %4 = vector.load %arg4[%c0_6, %c2, %c0_7, %c0_8] : memref<1x4x8x128xf32, #tpu.memory_space<vmem>>, vector<1x1x8x128xf32>
    %5 = vector.shape_cast %4 : vector<1x1x8x128xf32> to vector<8x128xf32>
    %c0_9 = arith.constant 0 : index
    %c3 = arith.constant 3 : index
    %c0_10 = arith.constant 0 : index
    %c0_11 = arith.constant 0 : index
    %6 = vector.load %arg4[%c0_9, %c3, %c0_10, %c0_11] : memref<1x4x8x128xf32, #tpu.memory_space<vmem>>, vector<1x1x8x128xf32>
    %7 = vector.shape_cast %6 : vector<1x1x8x128xf32> to vector<8x128xf32>
    %c0_12 = arith.constant 0 : index
    %c0_13 = arith.constant 0 : index
    %8 = memref.load %arg2[%c0_12, %c0_13] : memref<3x4xf32, #tpu.memory_space<smem>>
    %9 = vector.broadcast %8 : f32 to vector<8x128xf32>
    %10 = arith.mulf %1, %9 : vector<8x128xf32>
    %c0_14 = arith.constant 0 : index
    %11 = memref.load %arg3[%c0_14] : memref<3xf32, #tpu.memory_space<smem>>
    %12 = vector.broadcast %11 : f32 to vector<8x128xf32>
    %13 = arith.addf %10, %12 : vector<8x128xf32>
    %c0_15 = arith.constant 0 : index
    %c1_16 = arith.constant 1 : index
    %14 = memref.load %arg2[%c0_15, %c1_16] : memref<3x4xf32, #tpu.memory_space<smem>>
    %15 = vector.broadcast %14 : f32 to vector<8x128xf32>
    %16 = arith.mulf %3, %15 : vector<8x128xf32>
    %17 = arith.addf %13, %16 : vector<8x128xf32>
    %c0_17 = arith.constant 0 : index
    %c2_18 = arith.constant 2 : index
    %18 = memref.load %arg2[%c0_17, %c2_18] : memref<3x4xf32, #tpu.memory_space<smem>>
    %19 = vector.broadcast %18 : f32 to vector<8x128xf32>
    %20 = arith.mulf %5, %19 : vector<8x128xf32>
    %21 = arith.addf %17, %20 : vector<8x128xf32>
    %c0_19 = arith.constant 0 : index
    %c3_20 = arith.constant 3 : index
    %22 = memref.load %arg2[%c0_19, %c3_20] : memref<3x4xf32, #tpu.memory_space<smem>>
    %23 = vector.broadcast %22 : f32 to vector<8x128xf32>
    %24 = arith.mulf %7, %23 : vector<8x128xf32>
    %25 = arith.addf %21, %24 : vector<8x128xf32>
    %c0_21 = arith.constant 0 : index
    %c0_22 = arith.constant 0 : index
    %c0_23 = arith.constant 0 : index
    %c0_24 = arith.constant 0 : index
    %26 = vector.load %arg5[%c0_21, %c0_22, %c0_23, %c0_24] : memref<1x3x8x128xf32, #tpu.memory_space<vmem>>, vector<1x1x8x128xf32>
    %27 = vector.shape_cast %26 : vector<1x1x8x128xf32> to vector<8x128xf32>
    %28 = vector.shape_cast %25 : vector<8x128xf32> to vector<1x1x8x128xf32>
    tpu.vector_store %arg5[%c0_21, %c0_22, %c0_23, %c0_24], %28 {strides = array<i32>} : memref<1x3x8x128xf32, #tpu.memory_space<vmem>>, vector<1x1x8x128xf32>,
    %c1_25 = arith.constant 1 : index
    %c0_26 = arith.constant 0 : index
    %29 = memref.load %arg2[%c1_25, %c0_26] : memref<3x4xf32, #tpu.memory_space<smem>>
    %30 = vector.broadcast %29 : f32 to vector<8x128xf32>
    %31 = arith.mulf %1, %30 : vector<8x128xf32>
    %c1_27 = arith.constant 1 : index
    %32 = memref.load %arg3[%c1_27] : memref<3xf32, #tpu.memory_space<smem>>
    %33 = vector.broadcast %32 : f32 to vector<8x128xf32>
    %34 = arith.addf %31, %33 : vector<8x128xf32>
    %c1_28 = arith.constant 1 : index
    %c1_29 = arith.constant 1 : index
    %35 = memref.load %arg2[%c1_28, %c1_29] : memref<3x4xf32, #tpu.memory_space<smem>>
    %36 = vector.broadcast %35 : f32 to vector<8x128xf32>
    %37 = arith.mulf %3, %36 : vector<8x128xf32>
    %38 = arith.addf %34, %37 : vector<8x128xf32>
    %c1_30 = arith.constant 1 : index
    %c2_31 = arith.constant 2 : index
    %39 = memref.load %arg2[%c1_30, %c2_31] : memref<3x4xf32, #tpu.memory_space<smem>>
    %40 = vector.broadcast %39 : f32 to vector<8x128xf32>
    %41 = arith.mulf %5, %40 : vector<8x128xf32>
    %42 = arith.addf %38, %41 : vector<8x128xf32>
    %c1_32 = arith.constant 1 : index
    %c3_33 = arith.constant 3 : index
    %43 = memref.load %arg2[%c1_32, %c3_33] : memref<3x4xf32, #tpu.memory_space<smem>>
    %44 = vector.broadcast %43 : f32 to vector<8x128xf32>
    %45 = arith.mulf %7, %44 : vector<8x128xf32>
    %46 = arith.addf %42, %45 : vector<8x128xf32>
    %c0_34 = arith.constant 0 : index
    %c1_35 = arith.constant 1 : index
    %c0_36 = arith.constant 0 : index
    %c0_37 = arith.constant 0 : index
    %47 = vector.load %arg5[%c0_34, %c1_35, %c0_36, %c0_37] : memref<1x3x8x128xf32, #tpu.memory_space<vmem>>, vector<1x1x8x128xf32>
    %48 = vector.shape_cast %47 : vector<1x1x8x128xf32> to vector<8x128xf32>
    %49 = vector.shape_cast %46 : vector<8x128xf32> to vector<1x1x8x128xf32>
    tpu.vector_store %arg5[%c0_34, %c1_35, %c0_36, %c0_37], %49 {strides = array<i32>} : memref<1x3x8x128xf32, #tpu.memory_space<vmem>>, vector<1x1x8x128xf32>,
    %c2_38 = arith.constant 2 : index
    %c0_39 = arith.constant 0 : index
    %50 = memref.load %arg2[%c2_38, %c0_39] : memref<3x4xf32, #tpu.memory_space<smem>>
    %51 = vector.broadcast %50 : f32 to vector<8x128xf32>
    %52 = arith.mulf %1, %51 : vector<8x128xf32>
    %c2_40 = arith.constant 2 : index
    %53 = memref.load %arg3[%c2_40] : memref<3xf32, #tpu.memory_space<smem>>
    %54 = vector.broadcast %53 : f32 to vector<8x128xf32>
    %55 = arith.addf %52, %54 : vector<8x128xf32>
    %c2_41 = arith.constant 2 : index
    %c1_42 = arith.constant 1 : index
    %56 = memref.load %arg2[%c2_41, %c1_42] : memref<3x4xf32, #tpu.memory_space<smem>>
    %57 = vector.broadcast %56 : f32 to vector<8x128xf32>
    %58 = arith.mulf %3, %57 : vector<8x128xf32>
    %59 = arith.addf %55, %58 : vector<8x128xf32>
    %c2_43 = arith.constant 2 : index
    %c2_44 = arith.constant 2 : index
    %60 = memref.load %arg2[%c2_43, %c2_44] : memref<3x4xf32, #tpu.memory_space<smem>>
    %61 = vector.broadcast %60 : f32 to vector<8x128xf32>
    %62 = arith.mulf %5, %61 : vector<8x128xf32>
    %63 = arith.addf %59, %62 : vector<8x128xf32>
    %c2_45 = arith.constant 2 : index
    %c3_46 = arith.constant 3 : index
    %64 = memref.load %arg2[%c2_45, %c3_46] : memref<3x4xf32, #tpu.memory_space<smem>>
    %65 = vector.broadcast %64 : f32 to vector<8x128xf32>
    %66 = arith.mulf %7, %65 : vector<8x128xf32>
    %67 = arith.addf %63, %66 : vector<8x128xf32>
    %c0_47 = arith.constant 0 : index
    %c2_48 = arith.constant 2 : index
    %c0_49 = arith.constant 0 : index
    %c0_50 = arith.constant 0 : index
    %68 = vector.load %arg5[%c0_47, %c2_48, %c0_49, %c0_50] : memref<1x3x8x128xf32, #tpu.memory_space<vmem>>, vector<1x1x8x128xf32>
    %69 = vector.shape_cast %68 : vector<1x1x8x128xf32> to vector<8x128xf32>
    %70 = vector.shape_cast %67 : vector<8x128xf32> to vector<1x1x8x128xf32>
    tpu.vector_store %arg5[%c0_47, %c2_48, %c0_49, %c0_50], %70 {strides = array<i32>} : memref<1x3x8x128xf32, #tpu.memory_space<vmem>>, vector<1x1x8x128xf32>,
    return
  }
  func.func @transform_0(%arg0: i32, %arg1: i32) -> (i32, i32) {
    %c0_i32 = arith.constant 0 : i32
    %c0_i32_0 = arith.constant 0 : i32
    %c0_i32_1 = arith.constant 0 : i32
    return %c0_i32, %c0_i32_0 : i32, i32
  }
  func.func @transform_1(%arg0: i32, %arg1: i32) -> i32 {
    %c0_i32 = arith.constant 0 : i32
    %c0_i32_0 = arith.constant 0 : i32
    return %c0_i32 : i32
  }
  func.func @transform_2(%arg0: i32, %arg1: i32) -> (i32, i32, i32, i32) {
    %c0_i32 = arith.constant 0 : i32
    %c0_i32_0 = arith.constant 0 : i32
    %c0_i32_1 = arith.constant 0 : i32
    return %arg0, %c0_i32, %arg1, %c0_i32_0 : i32, i32, i32, i32
  }
  func.func @transform_3(%arg0: i32, %arg1: i32) -> (i32, i32, i32, i32) {
    %c0_i32 = arith.constant 0 : i32
    %c0_i32_0 = arith.constant 0 : i32
    %c0_i32_1 = arith.constant 0 : i32
    return %arg0, %c0_i32, %arg1, %c0_i32_0 : i32, i32, i32, i32
  }
}

</mosaic_0001>

<llo_original>
// kernel: tpu_custom_call.1
$region0: #{tpu_custom_call.1}
  #allocation0 [shape = 'u32[]', space=smem, size = 0x4, offset = 0x4, fixed_abs, tag = 'smem constant byte address 0x4 - core index']
  #allocation1 [shape = 'u32[144,128]{1,0:T(1,128)}', space=vmem, size = 0x12000, scoped, tag = 'internal scratch']
  %s0 = inlined_call_operand.hbm [shape: f32[3,4], index: 0, kind: input, shape index: {}]
  %s1 = inlined_call_operand.vmem [shape: f32[3], index: 1, kind: input, shape index: {}]
  %s2 = inlined_call_operand.hbm [shape: f32[2,4,8,128], index: 2, kind: input, shape index: {}]
  %s3 = inlined_call_operand.hbm [shape: f32[2,3,8,128], index: 3, kind: output, shape index: {}]
  %s4 = sld [smem:[#allocation0]]
  $region57: #{tpu_custom_call.1} parent=0
    _
  %s6 = ssub.s32 1, %s4
  %s7 = scalar_select 0, %s6, %s4
  $region1: #{tpu_custom_call.1} parent=0
    #allocation2 [shape = 'u8[2048]{0}', space=smem, size = 0x800, scoped, tag = 'input window, operand 0, single buffered']
    #allocation3 [shape = 's32[2]{0}', space=sflag, size = 0x8, scoped, tag = 'scoped memory for tpu_custom_call.1']
    #allocation4 [shape = 's32[2]{0}', space=sflag, size = 0x8, scoped, tag = 'scoped memory for tpu_custom_call.1']
    #allocation5 [shape = 's32[2]{0}', space=sflag, size = 0x8, scoped, tag = 'scoped memory for tpu_custom_call.1']
    #allocation6 [shape = 's32[2]{0}', space=sflag, size = 0x8, scoped, tag = 'scoped memory for tpu_custom_call.1']
    #allocation7 [shape = 'u8[512]{0}', space=smem, size = 0x200, scoped, tag = 'input window, operand 1, single buffered']
    #allocation8 [shape = 'u8[32768]{0}', space=vmem, size = 0x8000, scoped, tag = 'input window, operand 2']
    #allocation9 [shape = 'u8[24576]{0}', space=vmem, size = 0x6000, scoped, tag = 'output window, operand 0']
    %8 = vsyncpa [#allocation5], 0
    %9 = vsyncpa [#allocation6], 0
    %10 = vsyncpa [#allocation3], 0
    %s11 = scalar_lea.sflag [#allocation3], 1
    %12 = vsyncpa %s11, 0
    %13 = vsyncpa [#allocation4], 0
    %s14 = scalar_lea.sflag [#allocation4], 1
    %15 = vsyncpa %s14, 0
    loop: start=0, step=1, limit=4
    $region2: #{tpu_custom_call.1} parent=1 // loop_pre_header
      _
    $region3: #{tpu_custom_call.1} parent=1 // loop_header
      %s17 = sphi 0, %s21
      %p18 = scmp.ge.s32.totalorder %s17, 4
      %s24 = sphi 0, %s36
      %s25 = sphi 0, %s32
      %s26 = sphi 0, %s24
      %s27 = sphi 0, %s25
      %s28 = sphi 0, %s26
      %s29 = sphi 0, %s27
      %s37 = sphi 0, %s37
      %s39 = sphi 0, %s37
      %s40 = sphi 0, %s39
      %s54 = sphi 0, %s40
      %s58 = sphi 0, %s58
      %s60 = sphi 0, %s58
      %s61 = sphi 0, %s60
      %s75 = sphi 0, %s61
      %s83 = sphi 0, %s85
      %s86 = sphi 0, %s83
      %s87 = sphi 0, %s86
      %s103 = sphi 0, %s87
      %s111 = sphi 0, %s113
      %s114 = sphi 0, %s111
      %s115 = sphi 0, %s114
      %s131 = sphi 0, %s115
    $region4: #{tpu_custom_call.1} parent=1 // loop_header_branch
      %20 = sbr.rel (%p18) target = $region8
    $region5: #{tpu_custom_call.1} parent=1 // loop_body
      %s22 = ssub.s32 %s17, 1
      %s23 = ssub.s32 %s17, 2
      %s30 = sadd.s32 1, %s25
      %p31 = scmp.ge.s32.totalorder %s30, 1
      %s32 = scalar_select %p31, 0, %s30
      %s33 = sadd.s32 1, %s24
      %s34 = scalar_select %p31, %s33, %s24
      %p35 = scmp.ge.s32.totalorder %s34, 2
      %s36 = scalar_select %p35, 0, %s34
      %s38 = sadd.s32 %s37, 1
      %p41 = scmp.eq.s32.totalorder %s17, 1
      %p42 = scmp.ne.s32.totalorder %s37, %s39
      %p43 = scmp.eq.s32.totalorder %s17, 0
      %p44 = por %p42, %p43
      %p45 = scmp.ne.s32.totalorder %s37, %s39
      %p46 = scmp.eq.s32.totalorder %s22, 1
      %p47 = por %p45, %p46
      %p48 = scmp.ne.s32.totalorder %s39, %s40
      %p49 = scmp.eq.s32.totalorder %s22, 0
      %p50 = por %p48, %p49
      %p51 = scmp.ne.s32.totalorder %s39, %s40
      %p52 = scmp.eq.s32.totalorder %s23, 1
      %p53 = por %p51, %p52
      %p55 = scmp.ne.s32.totalorder %s40, %s54
      %p56 = scmp.eq.s32.totalorder %s23, 0
      %p57 = por %p55, %p56
      %s59 = sadd.s32 %s58, 1
      %p62 = scmp.eq.s32.totalorder %s17, 1
      %p63 = scmp.ne.s32.totalorder %s58, %s60
      %p64 = scmp.eq.s32.totalorder %s17, 0
      %p65 = por %p63, %p64
      %p66 = scmp.ne.s32.totalorder %s58, %s60
      %p67 = scmp.eq.s32.totalorder %s22, 1
      %p68 = por %p66, %p67
      %p69 = scmp.ne.s32.totalorder %s60, %s61
      %p70 = scmp.eq.s32.totalorder %s22, 0
      %p71 = por %p69, %p70
      %p72 = scmp.ne.s32.totalorder %s60, %s61
      %p73 = scmp.eq.s32.totalorder %s23, 1
      %p74 = por %p72, %p73
      %p76 = scmp.ne.s32.totalorder %s61, %s75
      %p77 = scmp.eq.s32.totalorder %s23, 0
      %p78 = por %p76, %p77
      %s79 = ssub.s32 %s24, %s36
      %s80 = ssub.s32 %s25, %s32
      %s81 = sor.u32 %s79, %s80
      %p82 = scmp.eq.s32.totalorder %s81, 0
      %s84 = sadd.s32 %s83, 1
      %s85 = scalar_select %p82, %s83, %s84
      %p88 = pneg %p82
      %p89 = scmp.eq.s32.totalorder %s17, 1
      %p90 = por %p88, %p89
      %p91 = scmp.ne.s32.totalorder %s83, %s86
      %p92 = scmp.eq.s32.totalorder %s17, 0
      %p93 = por %p91, %p92
      %p94 = scmp.ne.s32.totalorder %s83, %s86
      %p95 = scmp.eq.s32.totalorder %s22, 1
      %p96 = por %p94, %p95
      %p97 = scmp.ne.s32.totalorder %s86, %s87
      %p98 = scmp.eq.s32.totalorder %s22, 0
      %p99 = por %p97, %p98
      %p100 = scmp.ne.s32.totalorder %s86, %s87
      %p101 = scmp.eq.s32.totalorder %s23, 1
      %p102 = por %p100, %p101
      %p104 = scmp.ne.s32.totalorder %s87, %s103
      %p105 = scmp.eq.s32.totalorder %s23, 0
      %p106 = por %p104, %p105
      %s107 = ssub.s32 %s24, %s36
      %s108 = ssub.s32 %s25, %s32
      %s109 = sor.u32 %s107, %s108
      %p110 = scmp.eq.s32.totalorder %s109, 0
      %s112 = sadd.s32 %s111, 1
      %s113 = scalar_select %p110, %s111, %s112
      %p116 = pneg %p110
      %p117 = scmp.eq.s32.totalorder %s17, 1
      %p118 = por %p116, %p117
      %p119 = scmp.ne.s32.totalorder %s111, %s114
      %p120 = scmp.eq.s32.totalorder %s17, 0
      %p121 = por %p119, %p120
      %p122 = scmp.ne.s32.totalorder %s111, %s114
      %p123 = scmp.eq.s32.totalorder %s22, 1
      %p124 = por %p122, %p123
      %p125 = scmp.ne.s32.totalorder %s114, %s115
      %p126 = scmp.eq.s32.totalorder %s22, 0
      %p127 = por %p125, %p126
      %p128 = scmp.ne.s32.totalorder %s114, %s115
      %p129 = scmp.eq.s32.totalorder %s23, 1
      %p130 = por %p128, %p129
      %p132 = scmp.ne.s32.totalorder %s115, %s131
      %p133 = scmp.eq.s32.totalorder %s23, 0
      %p134 = por %p132, %p133
      %p135 = scmp.le.s32.totalorder 1, %s17
      %p136 = scmp.lt.s32.totalorder %s17, 3
      %p137 = pnand %p135, %p136
      %p138 = pneg %p137
      // Predicated region
      $region9: #{tpu_custom_call.1} parent=5 // pred_check
        _
      $region10: #{tpu_custom_call.1} parent=5 // pred_check_branch
        %140 = sbr.rel (%p137) target = $region12
      $region11: #{tpu_custom_call.1} parent=5 // pred_region
        %s141 = ssub.s32 %s17, 1
        // Predicated region
        $region13: #{tpu_custom_call.1} parent=11 // pred_check
          %p142 = pneg %p50
        $region14: #{tpu_custom_call.1} parent=11 // pred_check_branch
          %144 = sbr.rel (%p142) target = $region16
        $region15: #{tpu_custom_call.1} parent=11 // pred_region
          %s146 = ssub.s32 64, 64
          %147 = vsyncadd [#allocation5], %s146
          %150 = dma.hbm_to_smem %s0, 64, [#allocation2], [#allocation5]
        $region16: #{tpu_custom_call.1} parent=11 // pred_fallthru
          _
        // Predicated region
        $region17: #{tpu_custom_call.1} parent=11 // pred_check
          %p151 = pneg %p71
        $region18: #{tpu_custom_call.1} parent=11 // pred_check_branch
          %153 = sbr.rel (%p151) target = $region20
        $region19: #{tpu_custom_call.1} parent=11 // pred_region
          %s155 = ssub.s32 16, 16
          %156 = vsyncadd [#allocation6], %s155
          %s158 = sshll.u32 %s1, 4
          %s159 = int_to_ptr.vmem [resolvable:$true] %s158
          %161 = dma.vmem_to_smem %s159, 16, [#allocation7], [#allocation6]
        $region20: #{tpu_custom_call.1} parent=11 // pred_fallthru
          _
      $region12: #{tpu_custom_call.1} parent=5 // pred_fallthru
        _
      %p162 = scmp.lt.s32.totalorder %s17, 2
      // Predicated region
      $region21: #{tpu_custom_call.1} parent=5 // pred_check
        %p163 = pneg %p162
      $region22: #{tpu_custom_call.1} parent=5 // pred_check_branch
        %165 = sbr.rel (%p163) target = $region24
      $region23: #{tpu_custom_call.1} parent=5 // pred_region
        // Predicated region
        $region25: #{tpu_custom_call.1} parent=23 // pred_check
          %p166 = pneg %p93
        $region26: #{tpu_custom_call.1} parent=23 // pred_check_branch
          %168 = sbr.rel (%p166) target = $region28
        $region27: #{tpu_custom_call.1} parent=23 // pred_region
          %s169 = sand.u32 %s83, 1
          %s170 = scalar_lea.sflag [#allocation3], %s169
          %s171 = sand.u32 %s83, 1
          %s172 = smul.addr %s171, 32
          %s173 = scalar_lea.vmem [#allocation8], %s172
          %s175 = ssub.s32 512, 512
          %176 = vsyncadd %s170, %s175
          %s177 = smul.addr %s24, 4
          %s178 = sadd.s32 %s25, %s177
          %s179 = smul.addr %s178, 128
          %s180 = scalar_lea.hbm %s2, %s179
          %s181 = sshll.u32 %s173, 4
          %s182 = int_to_ptr.vmem [resolvable:$true] %s181
          %187 = dma.hbm_to_vmem [thread:$0]  %s180, 512, %s182, %s170, 128, 128, 8
        $region28: #{tpu_custom_call.1} parent=23 // pred_fallthru
          _
      $region24: #{tpu_custom_call.1} parent=5 // pred_fallthru
        _
      %p188 = scmp.le.s32.totalorder 1, %s17
      %p189 = scmp.lt.s32.totalorder %s17, 3
      %p190 = pnand %p188, %p189
      %p191 = pneg %p190
      // Predicated region
      $region29: #{tpu_custom_call.1} parent=5 // pred_check
        _
      $region30: #{tpu_custom_call.1} parent=5 // pred_check_branch
        %193 = sbr.rel (%p190) target = $region32
      $region31: #{tpu_custom_call.1} parent=5 // pred_region
        %s194 = ssub.s32 %s17, 1
        // Predicated region
        $region33: #{tpu_custom_call.1} parent=31 // pred_check
          %p195 = pneg %p50
        $region34: #{tpu_custom_call.1} parent=31 // pred_check_branch
          %197 = sbr.rel (%p195) target = $region36
        $region35: #{tpu_custom_call.1} parent=31 // pred_region
          %198 = dma.done [#allocation5], 64
        $region36: #{tpu_custom_call.1} parent=31 // pred_fallthru
          _
        // Predicated region
        $region37: #{tpu_custom_call.1} parent=31 // pred_check
          %p199 = pneg %p71
        $region38: #{tpu_custom_call.1} parent=31 // pred_check_branch
          %201 = sbr.rel (%p199) target = $region40
        $region39: #{tpu_custom_call.1} parent=31 // pred_region
          %202 = dma.done [#allocation6], 16
        $region40: #{tpu_custom_call.1} parent=31 // pred_fallthru
          _
        %s203 = sand.u32 %s86, 1
        %s204 = scalar_lea.sflag [#allocation3], %s203
        %s205 = sand.u32 %s86, 1
        %s206 = smul.addr %s205, 32
        %s207 = scalar_lea.vmem [#allocation8], %s206
        // Predicated region
        $region41: #{tpu_custom_call.1} parent=31 // pred_check
          %p208 = pneg %p99
        $region42: #{tpu_custom_call.1} parent=31 // pred_check_branch
          %210 = sbr.rel (%p208) target = $region44
        $region43: #{tpu_custom_call.1} parent=31 // pred_region
          %211 = dma.done %s204, 512
        $region44: #{tpu_custom_call.1} parent=31 // pred_fallthru
          _
        %212 = sfence
        %p213 = pneg %p50
        %p214 = pneg %p47
        %p215 = pneg %p71
        %p216 = pneg %p68
        %s217 = sand.u32 %s86, 1
        %s218 = scalar_lea.sflag [#allocation3], %s217
        %s219 = sand.u32 %s86, 1
        %s220 = smul.addr %s219, 32
        %s221 = scalar_lea.vmem [#allocation8], %s220
        %p222 = pneg %p99
        %p223 = pneg %p96
        %p224 = pneg %p127
        %p225 = pneg %p124
        %s226 = sand.u32 %s114, 1
        %s227 = scalar_lea.sflag [#allocation4], %s226
        %s228 = sand.u32 %s114, 1
        %s229 = smul.addr %s228, 24
        %s230 = scalar_lea.vmem [#allocation9], %s229
        %v231 = vld [vmem:[%s207] sm:$0xff]
        %s232 = scalar_lea.vmem %s207, 8 [#allocation8]
        %v233 = vld [vmem:[%s232] sm:$0xff]
        %s234 = scalar_lea.vmem %s207, 16 [#allocation8]
        %v235 = vld [vmem:[%s234] sm:$0xff]
        %s236 = scalar_lea.vmem %s207, 24 [#allocation8]
        %v237 = vld [vmem:[%s236] sm:$0xff]
        %s238 = sld [smem:[#allocation2]]
        %v239 = vstv %s238
        %v240 = vmul.f32 %v231, %v239
        %s241 = sld [smem:[#allocation7]]
        %v242 = vstv %s241
        %v243 = vadd.f32 %v240, %v242
        %s244 = sld [smem:[#allocation2 + $0x1]]
        %v245 = vstv %s244
        %v246 = vmul.f32 %v233, %v245
        %v247 = vadd.f32 %v243, %v246
        %s248 = sld [smem:[#allocation2 + $0x2]]
        %v249 = vstv %s248
        %v250 = vmul.f32 %v235, %v249
        %v251 = vadd.f32 %v247, %v250
        %s252 = sld [smem:[#allocation2 + $0x3]]
        %v253 = vstv %s252
        %v254 = vmul.f32 %v237, %v253
        %v255 = vadd.f32 %v251, %v254
        %256 = vst [vmem:[%s230] sm:$0xff] %v255
        %s257 = sld [smem:[#allocation2 + $0x80]]
        %v258 = vstv %s257
        %v259 = vmul.f32 %v231, %v258
        %s260 = sld [smem:[#allocation7 + $0x1]]
        %v261 = vstv %s260
        %v262 = vadd.f32 %v259, %v261
        %s263 = sld [smem:[#allocation2 + $0x81]]
        %v264 = vstv %s263
        %v265 = vmul.f32 %v233, %v264
        %v266 = vadd.f32 %v262, %v265
        %s267 = sld [smem:[#allocation2 + $0x82]]
        %v268 = vstv %s267
        %v269 = vmul.f32 %v235, %v268
        %v270 = vadd.f32 %v266, %v269
        %s271 = sld [smem:[#allocation2 + $0x83]]
        %v272 = vstv %s271
        %v273 = vmul.f32 %v237, %v272
        %v274 = vadd.f32 %v270, %v273
        %s275 = scalar_lea.vmem %s230, 8 [#allocation9]
        %276 = vst [vmem:[%s275] sm:$0xff] %v274
        %s277 = sld [smem:[#allocation2 + $0x100]]
        %v278 = vstv %s277
        %v279 = vmul.f32 %v231, %v278
        %s280 = sld [smem:[#allocation7 + $0x2]]
        %v281 = vstv %s280
        %v282 = vadd.f32 %v279, %v281
        %s283 = sld [smem:[#allocation2 + $0x101]]
        %v284 = vstv %s283
        %v285 = vmul.f32 %v233, %v284
        %v286 = vadd.f32 %v282, %v285
        %s287 = sld [smem:[#allocation2 + $0x102]]
        %v288 = vstv %s287
        %v289 = vmul.f32 %v235, %v288
        %v290 = vadd.f32 %v286, %v289
        %s291 = sld [smem:[#allocation2 + $0x103]]
        %v292 = vstv %s291
        %v293 = vmul.f32 %v237, %v292
        %v294 = vadd.f32 %v290, %v293
        %s295 = scalar_lea.vmem %s230, 16 [#allocation9]
        %296 = vst [vmem:[%s295] sm:$0xff] %v294
        %s297 = sand.u32 %s114, 1
        %s298 = scalar_lea.sflag [#allocation4], %s297
        %s299 = sand.u32 %s114, 1
        %s300 = smul.addr %s299, 24
        %s301 = scalar_lea.vmem [#allocation9], %s300
        // Predicated region
        $region45: #{tpu_custom_call.1} parent=31 // pred_check
          %p302 = pneg %p124
        $region46: #{tpu_custom_call.1} parent=31 // pred_check_branch
          %304 = sbr.rel (%p302) target = $region48
        $region47: #{tpu_custom_call.1} parent=31 // pred_region
          %s306 = ssub.s32 384, 384
          %307 = vsyncadd %s298, %s306
          %s308 = smul.addr %s26, 3
          %s309 = sadd.s32 %s27, %s308
          %s310 = smul.addr %s309, 128
          %s311 = scalar_lea.hbm %s3, %s310
          %s312 = sshll.u32 %s301, 4
          %s313 = int_to_ptr.vmem [resolvable:$true] %s312
          %318 = dma.vmem_to_hbm [thread:$0]  %s313, 384, %s311, %s298, 128, 128, 8
        $region48: #{tpu_custom_call.1} parent=31 // pred_fallthru
          _
      $region32: #{tpu_custom_call.1} parent=5 // pred_fallthru
        _
      %p319 = scmp.le.s32.totalorder 2, %s17
      // Predicated region
      $region49: #{tpu_custom_call.1} parent=5 // pred_check
        %p320 = pneg %p319
      $region50: #{tpu_custom_call.1} parent=5 // pred_check_branch
        %322 = sbr.rel (%p320) target = $region52
      $region51: #{tpu_custom_call.1} parent=5 // pred_region
        %s323 = ssub.s32 %s17, 2
        // Predicated region
        $region53: #{tpu_custom_call.1} parent=51 // pred_check
          %p324 = pneg %p130
        $region54: #{tpu_custom_call.1} parent=51 // pred_check_branch
          %326 = sbr.rel (%p324) target = $region56
        $region55: #{tpu_custom_call.1} parent=51 // pred_region
          %s327 = sand.u32 %s115, 1
          %s328 = scalar_lea.sflag [#allocation4], %s327
          %s329 = sand.u32 %s115, 1
          %s330 = smul.addr %s329, 24
          %s331 = scalar_lea.vmem [#allocation9], %s330
          %332 = dma.done %s328, 384
        $region56: #{tpu_custom_call.1} parent=51 // pred_fallthru
          _
      $region52: #{tpu_custom_call.1} parent=5 // pred_fallthru
        _
    $region6: #{tpu_custom_call.1} parent=1 // loop_footer
      %s21 = sadd.s32 1, %s17
    $region7: #{tpu_custom_call.1} parent=1 // loop_footer_branch
      %16 = sbr.rel target = $region3
    $region8: #{tpu_custom_call.1} parent=1 // loop_exit
      _
    %333 = vsyncpa [#allocation3], 1
    %s334 = scalar_lea.sflag [#allocation3], 1
    %335 = vsyncpa %s334, 1
    %336 = vsyncpa [#allocation4], 1
    %s337 = scalar_lea.sflag [#allocation4], 1
    %338 = vsyncpa %s337, 1
    %339 = vsyncpa [#allocation5], 1
    %s340 = scalar_lea.sflag [#allocation5], 1
    %341 = vsyncpa %s340, 1
    %342 = vsyncpa [#allocation6], 1
    %s343 = scalar_lea.sflag [#allocation6], 1
    %344 = vsyncpa %s343, 1

</llo_original>
